<compile_context>
chip_gen: v7x
topology: tpu7x:2x2x1
jax: 0.10.0
libtpu: 0.0.40
codegen_flags: <defaults>
</compile_context>

<pallas_src>
import functools

import jax
import jax.numpy as jnp
from jax.experimental import pallas as pl
from jax.experimental.pallas import tpu as pltpu


def _round_up(v, m):
    return ((v + m - 1) // m) * m


def _mish(x):
    # mish(x) = x * tanh(softplus(x)), computed with one transcendental (exp):
    #   t = (1 + e^x)^2 ; tanh(softplus(x)) = (t - 1)/(t + 1).
    # Numerator written as e*(2 + e) == t - 1 to avoid cancellation for x << 0.
    xc = jnp.minimum(x, 20.0)                       # overflow guard for exp
    e = jnp.exp(xc)
    num = e * (2.0 + e)                             # (1 + e)^2 - 1, no cancellation
    den = (1.0 + e) * (1.0 + e) + 1.0
    y = x * num * pl.reciprocal(den, approx=True)
    return jnp.where(x > 20.0, x, y)                # mish(x) ~= x for large x


def _layer(h, w_ref, b_ref):
    # bf16 MXU matmul, f32 accumulate, f32 elementwise.
    acc = jnp.dot(h.astype(jnp.bfloat16), w_ref[...],
                  preferred_element_type=jnp.float32)
    return _mish(acc + b_ref[...])


def _ae_kernel(x_ref,
               w1_ref, b1_ref,
               w2_ref, b2_ref,
               w3_ref, b3_ref,
               w4_ref, b4_ref,
               w5_ref, b5_ref,
               w6_ref, b6_ref,
               out_ref):
    h = x_ref[...]                                  # f32 (TILE_B, input_size)
    h = _layer(h, w1_ref, b1_ref)                   # encoder_1 -> 128 (pad 106)
    h = _layer(h, w2_ref, b2_ref)                   # encoder_2 -> 128 (pad 56)
    h = _layer(h, w3_ref, b3_ref)                   # encoder_3 -> 128 (pad latent)
    h = _layer(h, w4_ref, b4_ref)                   # decoder_1 -> 128 (pad 56)
    h = _layer(h, w5_ref, b5_ref)                   # decoder_2 -> 128 (pad 106)
    h = _layer(h, w6_ref, b6_ref)                   # decoder_3 -> input_size
    out_ref[...] = h.astype(out_ref.dtype)


@functools.partial(jax.jit, static_argnames=("tile_b",))
def autoencoder_forward(x, params, *, tile_b=4096):
    """x: (B, input_size) float32. params: flat tuple of (W bf16, b f32) pairs."""
    batch, input_size = x.shape

    # Tile choice: as big as tile_b, but keep >=2 grid steps when the batch
    # allows (v7x megacore sharding + pipeline depth), and never (much) bigger
    # than the batch itself.  Always a multiple of 8 (sublane constraint).
    tb = min(tile_b, _round_up(pl.cdiv(batch, 2), 16))
    tb = max(tb, 16)
    tb = min(tb, _round_up(batch, 8))
    grid = (pl.cdiv(batch, tb),)

    io_spec = pl.BlockSpec((tb, input_size), lambda i: (i, 0))
    # Weights/biases: full-array blocks with a constant index_map -> fetched
    # once, VMEM-resident for the whole grid.
    param_specs = [pl.BlockSpec(p.shape, lambda i: (0, 0)) for p in params]

    return pl.pallas_call(
        _ae_kernel,
        out_shape=jax.ShapeDtypeStruct((batch, input_size), jnp.float32),
        grid=grid,
        in_specs=[io_spec] + param_specs,
        out_specs=io_spec,
        compiler_params=pltpu.CompilerParams(
            dimension_semantics=("parallel",)),
    )(x, *params)


def _init_linear(key, fan_in, fan_out, pad_in, pad_out):
    """PyTorch-style init U(-1/sqrt(fan_in), 1/sqrt(fan_in)), zero-padded.

    Returns W as (pad_in, pad_out) bf16 (pre-transposed to x @ W layout) and
    b as (1, pad_out) f32.  Zero padding keeps the math exactly equivalent.
    """
    kw, kb = jax.random.split(key)
    bound = 1.0 / (fan_in ** 0.5)
    w = jax.random.uniform(kw, (fan_in, fan_out), jnp.float32, -bound, bound)
    b = jax.random.uniform(kb, (fan_out,), jnp.float32, -bound, bound)
    w_pad = jnp.zeros((pad_in, pad_out), jnp.float32).at[:fan_in, :fan_out].set(w)
    b_pad = jnp.zeros((1, pad_out), jnp.float32).at[0, :fan_out].set(b)
    return w_pad.astype(jnp.bfloat16), b_pad


def make_params(input_size, latent_size, seed=0):
    # All hidden/latent widths zero-padded to multiples of 128 (lane/MXU native).
    H1, H1P = 106, 128
    H2, H2P = 56, 128
    LATP = _round_up(latent_size, 128)
    dims = [
        (input_size, H1, input_size, H1P),    # encoder_1
        (H1, H2, H1P, H2P),                   # encoder_2
        (H2, latent_size, H2P, LATP),         # encoder_3
        (latent_size, H2, LATP, H2P),         # decoder_1
        (H2, H1, H2P, H1P),                   # decoder_2
        (H1, input_size, H1P, input_size),    # decoder_3
    ]
    keys = jax.random.split(jax.random.PRNGKey(seed), len(dims))
    params = []
    for k, (fi, fo, pi, po) in zip(keys, dims):
        w, b = _init_linear(k, fi, fo, pi, po)
        params.extend([w, b])
    return tuple(params)


def _ref_forward(x, params):
    """Pure-JAX reference (same padded weights, f32 math, exact mish)."""
    h = x
    for i in range(6):
        w = params[2 * i].astype(jnp.float32)
        b = params[2 * i + 1].astype(jnp.float32)
        h = h @ w + b[0]
        h = h * jnp.tanh(jnp.logaddexp(0.0, h))     # mish
    return h


if __name__ == "__main__":
    batch = 8
    input_size = 64
    latent_size = 16

    x = jax.random.normal(jax.random.PRNGKey(0), (batch, input_size), jnp.float32)
    params = make_params(input_size, latent_size, seed=0)

    out = autoencoder_forward(x, params)
    out = jax.block_until_ready(out)

    assert out.shape == (batch, input_size), out.shape
    assert out.dtype == jnp.float32
    assert bool(jnp.all(jnp.isfinite(out)))

    ref = _ref_forward(x, params)
    assert bool(jnp.allclose(out, ref, atol=5e-2, rtol=5e-2)), (
        float(jnp.max(jnp.abs(out - ref))))

    print("KERNEL_OK")
</pallas_src>

<mosaic_0001>
module attributes {stable_mosaic.version = 11 : i64} {
  func.func @_ae_kernel(%arg0: i32, %arg1: memref<8x64xf32, #tpu.memory_space<vmem>>, %arg2: memref<64x128xbf16, #tpu.memory_space<vmem>>, %arg3: memref<1x128xf32, #tpu.memory_space<vmem>>, %arg4: memref<128x128xbf16, #tpu.memory_space<vmem>>, %arg5: memref<1x128xf32, #tpu.memory_space<vmem>>, %arg6: memref<128x128xbf16, #tpu.memory_space<vmem>>, %arg7: memref<1x128xf32, #tpu.memory_space<vmem>>, %arg8: memref<128x128xbf16, #tpu.memory_space<vmem>>, %arg9: memref<1x128xf32, #tpu.memory_space<vmem>>, %arg10: memref<128x128xbf16, #tpu.memory_space<vmem>>, %arg11: memref<1x128xf32, #tpu.memory_space<vmem>>, %arg12: memref<128x64xbf16, #tpu.memory_space<vmem>>, %arg13: memref<1x64xf32, #tpu.memory_space<vmem>>, %arg14: memref<8x64xf32, #tpu.memory_space<vmem>>) attributes {dimension_semantics = [#tpu.dimension_semantics<parallel>], iteration_bounds = array<i64: 1>, scalar_prefetch = 0 : i64, scratch_operands = 0 : i64, tpu.core_type = #tpu.core_type<tc>, window_params = [{transform_indices = @transform_0, window_bounds = array<i64: 8, 64>}, {pipeline_mode = #tpu.pipeline_mode<synchronous>, transform_indices = @transform_1, window_bounds = array<i64: 64, 128>}, {pipeline_mode = #tpu.pipeline_mode<synchronous>, transform_indices = @transform_2, window_bounds = array<i64: 1, 128>}, {pipeline_mode = #tpu.pipeline_mode<synchronous>, transform_indices = @transform_3, window_bounds = array<i64: 128, 128>}, {pipeline_mode = #tpu.pipeline_mode<synchronous>, transform_indices = @transform_4, window_bounds = array<i64: 1, 128>}, {pipeline_mode = #tpu.pipeline_mode<synchronous>, transform_indices = @transform_5, window_bounds = array<i64: 128, 128>}, {pipeline_mode = #tpu.pipeline_mode<synchronous>, transform_indices = @transform_6, window_bounds = array<i64: 1, 128>}, {pipeline_mode = #tpu.pipeline_mode<synchronous>, transform_indices = @transform_7, window_bounds = array<i64: 128, 128>}, {pipeline_mode = #tpu.pipeline_mode<synchronous>, transform_indices = @transform_8, window_bounds = array<i64: 1, 128>}, {pipeline_mode = #tpu.pipeline_mode<synchronous>, transform_indices = @transform_9, window_bounds = array<i64: 128, 128>}, {pipeline_mode = #tpu.pipeline_mode<synchronous>, transform_indices = @transform_10, window_bounds = array<i64: 1, 128>}, {pipeline_mode = #tpu.pipeline_mode<synchronous>, transform_indices = @transform_11, window_bounds = array<i64: 128, 64>}, {pipeline_mode = #tpu.pipeline_mode<synchronous>, transform_indices = @transform_12, window_bounds = array<i64: 1, 64>}, {transform_indices = @transform_13, window_bounds = array<i64: 8, 64>}]} {
    %c0 = arith.constant 0 : index
    %c0_0 = arith.constant 0 : index
    %0 = vector.load %arg1[%c0, %c0_0] : memref<8x64xf32, #tpu.memory_space<vmem>>, vector<8x64xf32>
    %1 = arith.truncf %0 : vector<8x64xf32> to vector<8x64xbf16>
    %c0_1 = arith.constant 0 : index
    %c0_2 = arith.constant 0 : index
    %2 = vector.load %arg2[%c0_1, %c0_2] : memref<64x128xbf16, #tpu.memory_space<vmem>>, vector<64x128xbf16>
    %cst = arith.constant dense<0.000000e+00> : vector<8x128xf32>
    %3 = tpu.matmul %1, %2, %cst {dimension_numbers = #tpu.dot_dimension_numbers<[1], [0], [0], [1], [0, 0, 1, 1], [], []>} : vector<8x64xbf16>, vector<64x128xbf16>, vector<8x128xf32> -> vector<8x128xf32>
    %c0_3 = arith.constant 0 : index
    %c0_4 = arith.constant 0 : index
    %4 = vector.load %arg3[%c0_3, %c0_4] : memref<1x128xf32, #tpu.memory_space<vmem>>, vector<1x128xf32>
    %5 = vector.broadcast %4 : vector<1x128xf32> to vector<8x128xf32>
    %6 = arith.addf %3, %5 : vector<8x128xf32>
    %cst_5 = arith.constant 2.000000e+01 : f32
    %7 = vector.broadcast %cst_5 : f32 to vector<8x128xf32>
    %8 = arith.minimumf %6, %7 : vector<8x128xf32>
    %9 = math.exp %8 : vector<8x128xf32>
    %cst_6 = arith.constant 2.000000e+00 : f32
    %10 = vector.broadcast %cst_6 : f32 to vector<8x128xf32>
    %11 = arith.addf %10, %9 : vector<8x128xf32>
    %12 = arith.mulf %9, %11 : vector<8x128xf32>
    %cst_7 = arith.constant 1.000000e+00 : f32
    %13 = vector.broadcast %cst_7 : f32 to vector<8x128xf32>
    %14 = arith.addf %13, %9 : vector<8x128xf32>
    %cst_8 = arith.constant 1.000000e+00 : f32
    %15 = vector.broadcast %cst_8 : f32 to vector<8x128xf32>
    %16 = arith.addf %15, %9 : vector<8x128xf32>
    %17 = arith.mulf %14, %16 : vector<8x128xf32>
    %cst_9 = arith.constant 1.000000e+00 : f32
    %18 = vector.broadcast %cst_9 : f32 to vector<8x128xf32>
    %19 = arith.addf %17, %18 : vector<8x128xf32>
    %20 = arith.mulf %6, %12 : vector<8x128xf32>
    %21 = tpu.reciprocal %19 {approx = true} : vector<8x128xf32> -> vector<8x128xf32>
    %22 = arith.mulf %20, %21 : vector<8x128xf32>
    %cst_10 = arith.constant 2.000000e+01 : f32
    %23 = vector.broadcast %cst_10 : f32 to vector<8x128xf32>
    %24 = arith.cmpf ogt, %6, %23 : vector<8x128xf32>
    %25 = arith.select %24, %6, %22 : vector<8x128xi1>, vector<8x128xf32>
    %26 = arith.truncf %25 : vector<8x128xf32> to vector<8x128xbf16>
    %c0_11 = arith.constant 0 : index
    %c0_12 = arith.constant 0 : index
    %27 = vector.load %arg4[%c0_11, %c0_12] : memref<128x128xbf16, #tpu.memory_space<vmem>>, vector<128x128xbf16>
    %cst_13 = arith.constant dense<0.000000e+00> : vector<8x128xf32>
    %28 = tpu.matmul %26, %27, %cst_13 {dimension_numbers = #tpu.dot_dimension_numbers<[1], [0], [0], [1], [0, 0, 1, 1], [], []>} : vector<8x128xbf16>, vector<128x128xbf16>, vector<8x128xf32> -> vector<8x128xf32>
    %c0_14 = arith.constant 0 : index
    %c0_15 = arith.constant 0 : index
    %29 = vector.load %arg5[%c0_14, %c0_15] : memref<1x128xf32, #tpu.memory_space<vmem>>, vector<1x128xf32>
    %30 = vector.broadcast %29 : vector<1x128xf32> to vector<8x128xf32>
    %31 = arith.addf %28, %30 : vector<8x128xf32>
    %cst_16 = arith.constant 2.000000e+01 : f32
    %32 = vector.broadcast %cst_16 : f32 to vector<8x128xf32>
    %33 = arith.minimumf %31, %32 : vector<8x128xf32>
    %34 = math.exp %33 : vector<8x128xf32>
    %cst_17 = arith.constant 2.000000e+00 : f32
    %35 = vector.broadcast %cst_17 : f32 to vector<8x128xf32>
    %36 = arith.addf %35, %34 : vector<8x128xf32>
    %37 = arith.mulf %34, %36 : vector<8x128xf32>
    %cst_18 = arith.constant 1.000000e+00 : f32
    %38 = vector.broadcast %cst_18 : f32 to vector<8x128xf32>
    %39 = arith.addf %38, %34 : vector<8x128xf32>
    %cst_19 = arith.constant 1.000000e+00 : f32
    %40 = vector.broadcast %cst_19 : f32 to vector<8x128xf32>
    %41 = arith.addf %40, %34 : vector<8x128xf32>
    %42 = arith.mulf %39, %41 : vector<8x128xf32>
    %cst_20 = arith.constant 1.000000e+00 : f32
    %43 = vector.broadcast %cst_20 : f32 to vector<8x128xf32>
    %44 = arith.addf %42, %43 : vector<8x128xf32>
    %45 = arith.mulf %31, %37 : vector<8x128xf32>
    %46 = tpu.reciprocal %44 {approx = true} : vector<8x128xf32> -> vector<8x128xf32>
    %47 = arith.mulf %45, %46 : vector<8x128xf32>
    %cst_21 = arith.constant 2.000000e+01 : f32
    %48 = vector.broadcast %cst_21 : f32 to vector<8x128xf32>
    %49 = arith.cmpf ogt, %31, %48 : vector<8x128xf32>
    %50 = arith.select %49, %31, %47 : vector<8x128xi1>, vector<8x128xf32>
    %51 = arith.truncf %50 : vector<8x128xf32> to vector<8x128xbf16>
    %c0_22 = arith.constant 0 : index
    %c0_23 = arith.constant 0 : index
    %52 = vector.load %arg6[%c0_22, %c0_23] : memref<128x128xbf16, #tpu.memory_space<vmem>>, vector<128x128xbf16>
    %cst_24 = arith.constant dense<0.000000e+00> : vector<8x128xf32>
    %53 = tpu.matmul %51, %52, %cst_24 {dimension_numbers = #tpu.dot_dimension_numbers<[1], [0], [0], [1], [0, 0, 1, 1], [], []>} : vector<8x128xbf16>, vector<128x128xbf16>, vector<8x128xf32> -> vector<8x128xf32>
    %c0_25 = arith.constant 0 : index
    %c0_26 = arith.constant 0 : index
    %54 = vector.load %arg7[%c0_25, %c0_26] : memref<1x128xf32, #tpu.memory_space<vmem>>, vector<1x128xf32>
    %55 = vector.broadcast %54 : vector<1x128xf32> to vector<8x128xf32>
    %56 = arith.addf %53, %55 : vector<8x128xf32>
    %cst_27 = arith.constant 2.000000e+01 : f32
    %57 = vector.broadcast %cst_27 : f32 to vector<8x128xf32>
    %58 = arith.minimumf %56, %57 : vector<8x128xf32>
    %59 = math.exp %58 : vector<8x128xf32>
    %cst_28 = arith.constant 2.000000e+00 : f32
    %60 = vector.broadcast %cst_28 : f32 to vector<8x128xf32>
    %61 = arith.addf %60, %59 : vector<8x128xf32>
    %62 = arith.mulf %59, %61 : vector<8x128xf32>
    %cst_29 = arith.constant 1.000000e+00 : f32
    %63 = vector.broadcast %cst_29 : f32 to vector<8x128xf32>
    %64 = arith.addf %63, %59 : vector<8x128xf32>
    %cst_30 = arith.constant 1.000000e+00 : f32
    %65 = vector.broadcast %cst_30 : f32 to vector<8x128xf32>
    %66 = arith.addf %65, %59 : vector<8x128xf32>
    %67 = arith.mulf %64, %66 : vector<8x128xf32>
    %cst_31 = arith.constant 1.000000e+00 : f32
    %68 = vector.broadcast %cst_31 : f32 to vector<8x128xf32>
    %69 = arith.addf %67, %68 : vector<8x128xf32>
    %70 = arith.mulf %56, %62 : vector<8x128xf32>
    %71 = tpu.reciprocal %69 {approx = true} : vector<8x128xf32> -> vector<8x128xf32>
    %72 = arith.mulf %70, %71 : vector<8x128xf32>
    %cst_32 = arith.constant 2.000000e+01 : f32
    %73 = vector.broadcast %cst_32 : f32 to vector<8x128xf32>
    %74 = arith.cmpf ogt, %56, %73 : vector<8x128xf32>
    %75 = arith.select %74, %56, %72 : vector<8x128xi1>, vector<8x128xf32>
    %76 = arith.truncf %75 : vector<8x128xf32> to vector<8x128xbf16>
    %c0_33 = arith.constant 0 : index
    %c0_34 = arith.constant 0 : index
    %77 = vector.load %arg8[%c0_33, %c0_34] : memref<128x128xbf16, #tpu.memory_space<vmem>>, vector<128x128xbf16>
    %cst_35 = arith.constant dense<0.000000e+00> : vector<8x128xf32>
    %78 = tpu.matmul %76, %77, %cst_35 {dimension_numbers = #tpu.dot_dimension_numbers<[1], [0], [0], [1], [0, 0, 1, 1], [], []>} : vector<8x128xbf16>, vector<128x128xbf16>, vector<8x128xf32> -> vector<8x128xf32>
    %c0_36 = arith.constant 0 : index
    %c0_37 = arith.constant 0 : index
    %79 = vector.load %arg9[%c0_36, %c0_37] : memref<1x128xf32, #tpu.memory_space<vmem>>, vector<1x128xf32>
    %80 = vector.broadcast %79 : vector<1x128xf32> to vector<8x128xf32>
    %81 = arith.addf %78, %80 : vector<8x128xf32>
    %cst_38 = arith.constant 2.000000e+01 : f32
    %82 = vector.broadcast %cst_38 : f32 to vector<8x128xf32>
    %83 = arith.minimumf %81, %82 : vector<8x128xf32>
    %84 = math.exp %83 : vector<8x128xf32>
    %cst_39 = arith.constant 2.000000e+00 : f32
    %85 = vector.broadcast %cst_39 : f32 to vector<8x128xf32>
    %86 = arith.addf %85, %84 : vector<8x128xf32>
    %87 = arith.mulf %84, %86 : vector<8x128xf32>
    %cst_40 = arith.constant 1.000000e+00 : f32
    %88 = vector.broadcast %cst_40 : f32 to vector<8x128xf32>
    %89 = arith.addf %88, %84 : vector<8x128xf32>
    %cst_41 = arith.constant 1.000000e+00 : f32
    %90 = vector.broadcast %cst_41 : f32 to vector<8x128xf32>
    %91 = arith.addf %90, %84 : vector<8x128xf32>
    %92 = arith.mulf %89, %91 : vector<8x128xf32>
    %cst_42 = arith.constant 1.000000e+00 : f32
    %93 = vector.broadcast %cst_42 : f32 to vector<8x128xf32>
    %94 = arith.addf %92, %93 : vector<8x128xf32>
    %95 = arith.mulf %81, %87 : vector<8x128xf32>
    %96 = tpu.reciprocal %94 {approx = true} : vector<8x128xf32> -> vector<8x128xf32>
    %97 = arith.mulf %95, %96 : vector<8x128xf32>
    %cst_43 = arith.constant 2.000000e+01 : f32
    %98 = vector.broadcast %cst_43 : f32 to vector<8x128xf32>
    %99 = arith.cmpf ogt, %81, %98 : vector<8x128xf32>
    %100 = arith.select %99, %81, %97 : vector<8x128xi1>, vector<8x128xf32>
    %101 = arith.truncf %100 : vector<8x128xf32> to vector<8x128xbf16>
    %c0_44 = arith.constant 0 : index
    %c0_45 = arith.constant 0 : index
    %102 = vector.load %arg10[%c0_44, %c0_45] : memref<128x128xbf16, #tpu.memory_space<vmem>>, vector<128x128xbf16>
    %cst_46 = arith.constant dense<0.000000e+00> : vector<8x128xf32>
    %103 = tpu.matmul %101, %102, %cst_46 {dimension_numbers = #tpu.dot_dimension_numbers<[1], [0], [0], [1], [0, 0, 1, 1], [], []>} : vector<8x128xbf16>, vector<128x128xbf16>, vector<8x128xf32> -> vector<8x128xf32>
    %c0_47 = arith.constant 0 : index
    %c0_48 = arith.constant 0 : index
    %104 = vector.load %arg11[%c0_47, %c0_48] : memref<1x128xf32, #tpu.memory_space<vmem>>, vector<1x128xf32>
    %105 = vector.broadcast %104 : vector<1x128xf32> to vector<8x128xf32>
    %106 = arith.addf %103, %105 : vector<8x128xf32>
    %cst_49 = arith.constant 2.000000e+01 : f32
    %107 = vector.broadcast %cst_49 : f32 to vector<8x128xf32>
    %108 = arith.minimumf %106, %107 : vector<8x128xf32>
    %109 = math.exp %108 : vector<8x128xf32>
    %cst_50 = arith.constant 2.000000e+00 : f32
    %110 = vector.broadcast %cst_50 : f32 to vector<8x128xf32>
    %111 = arith.addf %110, %109 : vector<8x128xf32>
    %112 = arith.mulf %109, %111 : vector<8x128xf32>
    %cst_51 = arith.constant 1.000000e+00 : f32
    %113 = vector.broadcast %cst_51 : f32 to vector<8x128xf32>
    %114 = arith.addf %113, %109 : vector<8x128xf32>
    %cst_52 = arith.constant 1.000000e+00 : f32
    %115 = vector.broadcast %cst_52 : f32 to vector<8x128xf32>
    %116 = arith.addf %115, %109 : vector<8x128xf32>
    %117 = arith.mulf %114, %116 : vector<8x128xf32>
    %cst_53 = arith.constant 1.000000e+00 : f32
    %118 = vector.broadcast %cst_53 : f32 to vector<8x128xf32>
    %119 = arith.addf %117, %118 : vector<8x128xf32>
    %120 = arith.mulf %106, %112 : vector<8x128xf32>
    %121 = tpu.reciprocal %119 {approx = true} : vector<8x128xf32> -> vector<8x128xf32>
    %122 = arith.mulf %120, %121 : vector<8x128xf32>
    %cst_54 = arith.constant 2.000000e+01 : f32
    %123 = vector.broadcast %cst_54 : f32 to vector<8x128xf32>
    %124 = arith.cmpf ogt, %106, %123 : vector<8x128xf32>
    %125 = arith.select %124, %106, %122 : vector<8x128xi1>, vector<8x128xf32>
    %126 = arith.truncf %125 : vector<8x128xf32> to vector<8x128xbf16>
    %c0_55 = arith.constant 0 : index
    %c0_56 = arith.constant 0 : index
    %127 = vector.load %arg12[%c0_55, %c0_56] : memref<128x64xbf16, #tpu.memory_space<vmem>>, vector<128x64xbf16>
    %cst_57 = arith.constant dense<0.000000e+00> : vector<8x64xf32>
    %128 = tpu.matmul %126, %127, %cst_57 {dimension_numbers = #tpu.dot_dimension_numbers<[1], [0], [0], [1], [0, 0, 1, 1], [], []>} : vector<8x128xbf16>, vector<128x64xbf16>, vector<8x64xf32> -> vector<8x64xf32>
    %c0_58 = arith.constant 0 : index
    %c0_59 = arith.constant 0 : index
    %129 = vector.load %arg13[%c0_58, %c0_59] : memref<1x64xf32, #tpu.memory_space<vmem>>, vector<1x64xf32>
    %130 = vector.broadcast %129 : vector<1x64xf32> to vector<8x64xf32>
    %131 = arith.addf %128, %130 : vector<8x64xf32>
    %cst_60 = arith.constant 2.000000e+01 : f32
    %132 = vector.broadcast %cst_60 : f32 to vector<8x64xf32>
    %133 = arith.minimumf %131, %132 : vector<8x64xf32>
    %134 = math.exp %133 : vector<8x64xf32>
    %cst_61 = arith.constant 2.000000e+00 : f32
    %135 = vector.broadcast %cst_61 : f32 to vector<8x64xf32>
    %136 = arith.addf %135, %134 : vector<8x64xf32>
    %137 = arith.mulf %134, %136 : vector<8x64xf32>
    %cst_62 = arith.constant 1.000000e+00 : f32
    %138 = vector.broadcast %cst_62 : f32 to vector<8x64xf32>
    %139 = arith.addf %138, %134 : vector<8x64xf32>
    %cst_63 = arith.constant 1.000000e+00 : f32
    %140 = vector.broadcast %cst_63 : f32 to vector<8x64xf32>
    %141 = arith.addf %140, %134 : vector<8x64xf32>
    %142 = arith.mulf %139, %141 : vector<8x64xf32>
    %cst_64 = arith.constant 1.000000e+00 : f32
    %143 = vector.broadcast %cst_64 : f32 to vector<8x64xf32>
    %144 = arith.addf %142, %143 : vector<8x64xf32>
    %145 = arith.mulf %131, %137 : vector<8x64xf32>
    %146 = tpu.reciprocal %144 {approx = true} : vector<8x64xf32> -> vector<8x64xf32>
    %147 = arith.mulf %145, %146 : vector<8x64xf32>
    %cst_65 = arith.constant 2.000000e+01 : f32
    %148 = vector.broadcast %cst_65 : f32 to vector<8x64xf32>
    %149 = arith.cmpf ogt, %131, %148 : vector<8x64xf32>
    %150 = arith.select %149, %131, %147 : vector<8x64xi1>, vector<8x64xf32>
    %c0_66 = arith.constant 0 : index
    %c0_67 = arith.constant 0 : index
    %151 = vector.load %arg14[%c0_66, %c0_67] : memref<8x64xf32, #tpu.memory_space<vmem>>, vector<8x64xf32>
    tpu.vector_store %arg14[%c0_66, %c0_67], %150 {strides = array<i32>} : memref<8x64xf32, #tpu.memory_space<vmem>>, vector<8x64xf32>,
    return
  }
  func.func @transform_0(%arg0: i32) -> (i32, i32) {
    %c0_i32 = arith.constant 0 : i32
    %c0_i32_0 = arith.constant 0 : i32
    return %arg0, %c0_i32 : i32, i32
  }
  func.func @transform_1(%arg0: i32) -> (i32, i32) {
    %c0_i32 = arith.constant 0 : i32
    %c0_i32_0 = arith.constant 0 : i32
    %c0_i32_1 = arith.constant 0 : i32
    return %c0_i32, %c0_i32_0 : i32, i32
  }
  func.func @transform_2(%arg0: i32) -> (i32, i32) {
    %c0_i32 = arith.constant 0 : i32
    %c0_i32_0 = arith.constant 0 : i32
    %c0_i32_1 = arith.constant 0 : i32
    return %c0_i32, %c0_i32_0 : i32, i32
  }
  func.func @transform_3(%arg0: i32) -> (i32, i32) {
    %c0_i32 = arith.constant 0 : i32
    %c0_i32_0 = arith.constant 0 : i32
    %c0_i32_1 = arith.constant 0 : i32
    return %c0_i32, %c0_i32_0 : i32, i32
  }
  func.func @transform_4(%arg0: i32) -> (i32, i32) {
    %c0_i32 = arith.constant 0 : i32
    %c0_i32_0 = arith.constant 0 : i32
    %c0_i32_1 = arith.constant 0 : i32
    return %c0_i32, %c0_i32_0 : i32, i32
  }
  func.func @transform_5(%arg0: i32) -> (i32, i32) {
    %c0_i32 = arith.constant 0 : i32
    %c0_i32_0 = arith.constant 0 : i32
    %c0_i32_1 = arith.constant 0 : i32
    return %c0_i32, %c0_i32_0 : i32, i32
  }
  func.func @transform_6(%arg0: i32) -> (i32, i32) {
    %c0_i32 = arith.constant 0 : i32
    %c0_i32_0 = arith.constant 0 : i32
    %c0_i32_1 = arith.constant 0 : i32
    return %c0_i32, %c0_i32_0 : i32, i32
  }
  func.func @transform_7(%arg0: i32) -> (i32, i32) {
    %c0_i32 = arith.constant 0 : i32
    %c0_i32_0 = arith.constant 0 : i32
    %c0_i32_1 = arith.constant 0 : i32
    return %c0_i32, %c0_i32_0 : i32, i32
  }
  func.func @transform_8(%arg0: i32) -> (i32, i32) {
    %c0_i32 = arith.constant 0 : i32
    %c0_i32_0 = arith.constant 0 : i32
    %c0_i32_1 = arith.constant 0 : i32
    return %c0_i32, %c0_i32_0 : i32, i32
  }
  func.func @transform_9(%arg0: i32) -> (i32, i32) {
    %c0_i32 = arith.constant 0 : i32
    %c0_i32_0 = arith.constant 0 : i32
    %c0_i32_1 = arith.constant 0 : i32
    return %c0_i32, %c0_i32_0 : i32, i32
  }
  func.func @transform_10(%arg0: i32) -> (i32, i32) {
    %c0_i32 = arith.constant 0 : i32
    %c0_i32_0 = arith.constant 0 : i32
    %c0_i32_1 = arith.constant 0 : i32
    return %c0_i32, %c0_i32_0 : i32, i32
  }
  func.func @transform_11(%arg0: i32) -> (i32, i32) {
    %c0_i32 = arith.constant 0 : i32
    %c0_i32_0 = arith.constant 0 : i32
    %c0_i32_1 = arith.constant 0 : i32
    return %c0_i32, %c0_i32_0 : i32, i32
  }
  func.func @transform_12(%arg0: i32) -> (i32, i32) {
    %c0_i32 = arith.constant 0 : i32
    %c0_i32_0 = arith.constant 0 : i32
    %c0_i32_1 = arith.constant 0 : i32
    return %c0_i32, %c0_i32_0 : i32, i32
  }
  func.func @transform_13(%arg0: i32) -> (i32, i32) {
    %c0_i32 = arith.constant 0 : i32
    %c0_i32_0 = arith.constant 0 : i32
    return %arg0, %c0_i32 : i32, i32
  }
}

</mosaic_0001>

<llo_original>
// kernel: autoencoder_forward.1
$region0: #{autoencoder_forward.1}
  #allocation0 [shape = 'u32[]', space=smem, size = 0x4, offset = 0x4, fixed_abs, tag = 'smem constant byte address 0x4 - core index']
  #allocation1 [shape = 'u32[144,128]{1,0:T(1,128)}', space=vmem, size = 0x12000, scoped, tag = 'internal scratch']
  %s0 = inlined_call_operand.hbm [shape: f32[8,64], index: 0, kind: input, shape index: {}]
  %s1 = inlined_call_operand.hbm [shape: bf16[64,128], index: 1, kind: input, shape index: {}]
  %s2 = inlined_call_operand.vmem [shape: f32[1,128], index: 2, kind: input, shape index: {}]
  %s3 = inlined_call_operand.vmem [shape: bf16[128,128], index: 3, kind: input, shape index: {}]
  %s4 = inlined_call_operand.vmem [shape: f32[1,128], index: 4, kind: input, shape index: {}]
  %s5 = inlined_call_operand.hbm [shape: bf16[128,128], index: 5, kind: input, shape index: {}]
  %s6 = inlined_call_operand.hbm [shape: f32[1,128], index: 6, kind: input, shape index: {}]
  %s7 = inlined_call_operand.hbm [shape: bf16[128,128], index: 7, kind: input, shape index: {}]
  %s8 = inlined_call_operand.hbm [shape: f32[1,128], index: 8, kind: input, shape index: {}]
  %s9 = inlined_call_operand.vmem [shape: bf16[128,128], index: 9, kind: input, shape index: {}]
  %s10 = inlined_call_operand.vmem [shape: f32[1,128], index: 10, kind: input, shape index: {}]
  %s11 = inlined_call_operand.vmem [shape: bf16[128,64], index: 11, kind: input, shape index: {}]
  %s12 = inlined_call_operand.vmem [shape: f32[1,64], index: 12, kind: input, shape index: {}]
  %s13 = inlined_call_operand.hbm [shape: f32[8,64], index: 13, kind: output, shape index: {}]
  %s14 = sld [smem:[#allocation0]]
  $region86: #{autoencoder_forward.1} parent=0
    _
  %s16 = ssub.s32 1, %s14
  %s17 = scalar_select 0, %s16, %s14
  $region1: #{autoencoder_forward.1} parent=0
    #allocation2 [shape = 'u8[4096]{0}', space=vmem, size = 0x1000, scoped, tag = 'input window, operand 0, single buffered']
    #allocation3 [shape = 's32[1]{0}', space=sflag, size = 0x4, scoped, tag = 'scoped memory for autoencoder_forward.1']
    #allocation4 [shape = 's32[1]{0}', space=sflag, size = 0x4, scoped, tag = 'scoped memory for autoencoder_forward.1']
    #allocation5 [shape = 'u8[16384]{0}', space=vmem, size = 0x4000, scoped, tag = 'input window, operand 1, single buffered']
    #allocation6 [shape = 's32[1]{0}', space=sflag, size = 0x4, scoped, tag = 'scoped memory for autoencoder_forward.1']
    #allocation7 [shape = 'u8[32768]{0}', space=vmem, size = 0x8000, scoped, tag = 'input window, operand 5, single buffered']
    #allocation8 [shape = 'u8[512]{0}', space=vmem, size = 0x400, scoped, tag = 'input window, operand 6, single buffered']
    #allocation9 [shape = 's32[1]{0}', space=sflag, size = 0x4, scoped, tag = 'scoped memory for autoencoder_forward.1']
    #allocation10 [shape = 'u8[32768]{0}', space=vmem, size = 0x8000, scoped, tag = 'input window, operand 7, single buffered']
    #allocation11 [shape = 'u8[512]{0}', space=vmem, size = 0x400, scoped, tag = 'input window, operand 8, single buffered']
    #allocation12 [shape = 's32[1]{0}', space=sflag, size = 0x4, scoped, tag = 'scoped memory for autoencoder_forward.1']
    #allocation13 [shape = 'u8[4096]{0}', space=vmem, size = 0x1000, scoped, tag = 'output window, operand 0, single buffered']
    %18 = vsyncpa [#allocation3], 0
    %19 = vsyncpa [#allocation6], 0
    %20 = vsyncpa [#allocation9], 0
    %21 = vsyncpa [#allocation12], 0
    %22 = vsyncpa [#allocation4], 0
    // Predicated region
    $region2: #{autoencoder_forward.1} parent=1 // pred_check
      _
    $region3: #{autoencoder_forward.1} parent=1 // pred_check_branch
      %24 = sbr.rel (0) target = $region5
    $region4: #{autoencoder_forward.1} parent=1 // pred_region
      %s26 = ssub.s32 128, 128
      %27 = vsyncadd [#allocation3], %s26
      %s29 = sshll.u32 [#allocation2], 4
      %s30 = int_to_ptr.vmem [resolvable:$true] %s29
      %32 = dma.hbm_to_vmem [thread:$0]  %s0, 128, %s30, [#allocation3]
    $region5: #{autoencoder_forward.1} parent=1 // pred_fallthru
      _
    // Predicated region
    $region6: #{autoencoder_forward.1} parent=1 // pred_check
      _
    $region7: #{autoencoder_forward.1} parent=1 // pred_check_branch
      %34 = sbr.rel (0) target = $region9
    $region8: #{autoencoder_forward.1} parent=1 // pred_region
      %s36 = ssub.s32 512, 512
      %37 = vsyncadd [#allocation6], %s36
      %s38 = sshll.u32 [#allocation5], 4
      %s39 = int_to_ptr.vmem [resolvable:$true] %s38
      %44 = dma.hbm_to_vmem [thread:$0]  %s1, 512, %s39, [#allocation6], 64, 64, 4
    $region9: #{autoencoder_forward.1} parent=1 // pred_fallthru
      _
    // Predicated region
    $region10: #{autoencoder_forward.1} parent=1 // pred_check
      _
    $region11: #{autoencoder_forward.1} parent=1 // pred_check_branch
      %46 = sbr.rel (0) target = $region13
    $region12: #{autoencoder_forward.1} parent=1 // pred_region
      _
    $region13: #{autoencoder_forward.1} parent=1 // pred_fallthru
      _
    // Predicated region
    $region14: #{autoencoder_forward.1} parent=1 // pred_check
      _
    $region15: #{autoencoder_forward.1} parent=1 // pred_check_branch
      %48 = sbr.rel (0) target = $region17
    $region16: #{autoencoder_forward.1} parent=1 // pred_region
      _
    $region17: #{autoencoder_forward.1} parent=1 // pred_fallthru
      _
    // Predicated region
    $region18: #{autoencoder_forward.1} parent=1 // pred_check
      _
    $region19: #{autoencoder_forward.1} parent=1 // pred_check_branch
      %50 = sbr.rel (0) target = $region21
    $region20: #{autoencoder_forward.1} parent=1 // pred_region
      _
    $region21: #{autoencoder_forward.1} parent=1 // pred_fallthru
      _
    // Predicated region
    $region22: #{autoencoder_forward.1} parent=1 // pred_check
      _
    $region23: #{autoencoder_forward.1} parent=1 // pred_check_branch
      %52 = sbr.rel (0) target = $region25
    $region24: #{autoencoder_forward.1} parent=1 // pred_region
      %s54 = ssub.s32 1024, 1024
      %55 = vsyncadd [#allocation6], %s54
      %s56 = sshll.u32 [#allocation7], 4
      %s57 = int_to_ptr.vmem [resolvable:$true] %s56
      %62 = dma.hbm_to_vmem [thread:$0]  %s5, 1024, %s57, [#allocation6], 64, 64, 4
    $region25: #{autoencoder_forward.1} parent=1 // pred_fallthru
      _
    // Predicated region
    $region26: #{autoencoder_forward.1} parent=1 // pred_check
      _
    $region27: #{autoencoder_forward.1} parent=1 // pred_check_branch
      %64 = sbr.rel (0) target = $region29
    $region28: #{autoencoder_forward.1} parent=1 // pred_region
      %s66 = ssub.s32 16, 16
      %67 = vsyncadd [#allocation9], %s66
      %s69 = sshll.u32 [#allocation8], 4
      %s70 = int_to_ptr.vmem [resolvable:$true] %s69
      %72 = dma.hbm_to_vmem [thread:$0]  %s6, 16, %s70, [#allocation9]
    $region29: #{autoencoder_forward.1} parent=1 // pred_fallthru
      _
    // Predicated region
    $region30: #{autoencoder_forward.1} parent=1 // pred_check
      _
    $region31: #{autoencoder_forward.1} parent=1 // pred_check_branch
      %74 = sbr.rel (0) target = $region33
    $region32: #{autoencoder_forward.1} parent=1 // pred_region
      %s76 = ssub.s32 1024, 1024
      %77 = vsyncadd [#allocation9], %s76
      %s78 = sshll.u32 [#allocation10], 4
      %s79 = int_to_ptr.vmem [resolvable:$true] %s78
      %84 = dma.hbm_to_vmem [thread:$0]  %s7, 1024, %s79, [#allocation9], 64, 64, 4
    $region33: #{autoencoder_forward.1} parent=1 // pred_fallthru
      _
    // Predicated region
    $region34: #{autoencoder_forward.1} parent=1 // pred_check
      _
    $region35: #{autoencoder_forward.1} parent=1 // pred_check_branch
      %86 = sbr.rel (0) target = $region37
    $region36: #{autoencoder_forward.1} parent=1 // pred_region
      %s88 = ssub.s32 16, 16
      %89 = vsyncadd [#allocation12], %s88
      %s91 = sshll.u32 [#allocation11], 4
      %s92 = int_to_ptr.vmem [resolvable:$true] %s91
      %94 = dma.hbm_to_vmem [thread:$0]  %s8, 16, %s92, [#allocation12]
    $region37: #{autoencoder_forward.1} parent=1 // pred_fallthru
      _
    // Predicated region
    $region38: #{autoencoder_forward.1} parent=1 // pred_check
      _
    $region39: #{autoencoder_forward.1} parent=1 // pred_check_branch
      %96 = sbr.rel (0) target = $region41
    $region40: #{autoencoder_forward.1} parent=1 // pred_region
      _
    $region41: #{autoencoder_forward.1} parent=1 // pred_fallthru
      _
    // Predicated region
    $region42: #{autoencoder_forward.1} parent=1 // pred_check
      _
    $region43: #{autoencoder_forward.1} parent=1 // pred_check_branch
      %98 = sbr.rel (0) target = $region45
    $region44: #{autoencoder_forward.1} parent=1 // pred_region
      _
    $region45: #{autoencoder_forward.1} parent=1 // pred_fallthru
      _
    // Predicated region
    $region46: #{autoencoder_forward.1} parent=1 // pred_check
      _
    $region47: #{autoencoder_forward.1} parent=1 // pred_check_branch
      %100 = sbr.rel (0) target = $region49
    $region48: #{autoencoder_forward.1} parent=1 // pred_region
      _
    $region49: #{autoencoder_forward.1} parent=1 // pred_fallthru
      _
    // Predicated region
    $region50: #{autoencoder_forward.1} parent=1 // pred_check
      _
    $region51: #{autoencoder_forward.1} parent=1 // pred_check_branch
      %102 = sbr.rel (0) target = $region53
    $region52: #{autoencoder_forward.1} parent=1 // pred_region
      _
    $region53: #{autoencoder_forward.1} parent=1 // pred_fallthru
      _
    // Predicated region
    $region54: #{autoencoder_forward.1} parent=1 // pred_check
      _
    $region55: #{autoencoder_forward.1} parent=1 // pred_check_branch
      %104 = sbr.rel (0) target = $region57
    $region56: #{autoencoder_forward.1} parent=1 // pred_region
      %105 = dma.done [#allocation3], 128
    $region57: #{autoencoder_forward.1} parent=1 // pred_fallthru
      _
    // Predicated region
    $region58: #{autoencoder_forward.1} parent=1 // pred_check
      _
    $region59: #{autoencoder_forward.1} parent=1 // pred_check_branch
      %107 = sbr.rel (0) target = $region61
    $region60: #{autoencoder_forward.1} parent=1 // pred_region
      %108 = dma.done [#allocation6], 512
    $region61: #{autoencoder_forward.1} parent=1 // pred_fallthru
      _
    // Predicated region
    $region62: #{autoencoder_forward.1} parent=1 // pred_check
      _
    $region63: #{autoencoder_forward.1} parent=1 // pred_check_branch
      %110 = sbr.rel (0) target = $region65
    $region64: #{autoencoder_forward.1} parent=1 // pred_region
      %111 = dma.done [#allocation6], 1024
    $region65: #{autoencoder_forward.1} parent=1 // pred_fallthru
      _
    // Predicated region
    $region66: #{autoencoder_forward.1} parent=1 // pred_check
      _
    $region67: #{autoencoder_forward.1} parent=1 // pred_check_branch
      %113 = sbr.rel (0) target = $region69
    $region68: #{autoencoder_forward.1} parent=1 // pred_region
      %114 = dma.done [#allocation9], 16
    $region69: #{autoencoder_forward.1} parent=1 // pred_fallthru
      _
    // Predicated region
    $region70: #{autoencoder_forward.1} parent=1 // pred_check
      _
    $region71: #{autoencoder_forward.1} parent=1 // pred_check_branch
      %116 = sbr.rel (0) target = $region73
    $region72: #{autoencoder_forward.1} parent=1 // pred_region
      %117 = dma.done [#allocation9], 1024
    $region73: #{autoencoder_forward.1} parent=1 // pred_fallthru
      _
    // Predicated region
    $region74: #{autoencoder_forward.1} parent=1 // pred_check
      _
    $region75: #{autoencoder_forward.1} parent=1 // pred_check_branch
      %119 = sbr.rel (0) target = $region77
    $region76: #{autoencoder_forward.1} parent=1 // pred_region
      %120 = dma.done [#allocation12], 16
    $region77: #{autoencoder_forward.1} parent=1 // pred_fallthru
      _
    %v122 = vld [vmem:[#allocation2] sm:$0xff]
    %v123 = vpack.c.bf16 %v122, %v122
    %v124 = vld [vmem:[#allocation5] sm:$0xf]
    %v125 = vld [vmem:[#allocation5 + $0x4] sm:$0xf]
    %v126 = vld [vmem:[#allocation5 + $0x8] sm:$0xf]
    %v127 = vld [vmem:[#allocation5 + $0xc] sm:$0xf]
    %v128 = vld [vmem:[#allocation5 + $0x10] sm:$0xf]
    %v129 = vld [vmem:[#allocation5 + $0x14] sm:$0xf]
    %v130 = vld [vmem:[#allocation5 + $0x18] sm:$0xf]
    %v131 = vld [vmem:[#allocation5 + $0x1c] sm:$0xf]
    %v132 = vld [vmem:[%s2] sm:$0x1]
    %v134 = vlaneseq
    %v135 = vshrl.u32 %v134, 7
    %v136 = vsub.s32 0, %v135
    %v137 = vrot.slane %v132, %v136
    %v147 = vunpack.c.l.b16 %v124
    %v148 = vunpack.c.l.b16 %v125
    %v149 = vunpack.c.l.b16 %v126
    %v150 = vunpack.c.l.b16 %v127
    %v151 = vunpack.c.l.b16 %v128
    %v152 = vunpack.c.l.b16 %v129
    %v153 = vunpack.c.l.b16 %v130
    %v154 = vunpack.c.l.b16 %v131
    %v155 = vpack.c.b16 %v148, %v147
    %v156 = vpack.c.b16 %v150, %v149
    %v157 = vpack.c.b16 %v152, %v151
    %v158 = vpack.c.b16 %v154, %v153
    %vm163 = vcmask 523264
    %v165 = vsel %vm163, %v123, 0
    %167 = vmatprep.subr.bf16.mxu0 0
    %168 = vmatpush1.bf16.msra.mxu0 %v155
    %169 = vmatprep.subr.bf16.mxu0 0
    %170 = vmatpush1.bf16.msra.mxu0 %v156
    %171 = vmatprep.subr.bf16.mxu0 0
    %172 = vmatpush1.bf16.msra.mxu0 %v157
    %173 = vmatprep.subr.bf16.mxu0 0
    %174 = vmatpush1.bf16.msra.mxu0 %v158
    %175 = vmatprep.subr.bf16.mxu0 0
    %176 = vmatpush1.bf16.msra.mxu0 0
    %177 = vmatprep.subr.bf16.mxu0 0
    %178 = vmatpush1.bf16.msra.mxu0 0
    %179 = vmatprep.subr.bf16.mxu0 0
    %180 = vmatpush1.bf16.msra.mxu0 0
    %181 = vmatprep.subr.bf16.mxu0 0
    %182 = vmatpush1.bf16.msra.mxu0 0
    %183 = vmatprep.subr.bf16.mxu0 0
    %184 = vmatpush1.bf16.msra.mxu0 0
    %185 = vmatprep.subr.bf16.mxu0 0
    %186 = vmatpush1.bf16.msra.mxu0 0
    %187 = vmatprep.subr.bf16.mxu0 0
    %188 = vmatpush1.bf16.msra.mxu0 0
    %189 = vmatprep.subr.bf16.mxu0 0
    %190 = vmatpush1.bf16.msra.mxu0 0
    %191 = vmatprep.subr.bf16.mxu0 0
    %192 = vmatpush1.bf16.msra.mxu0 0
    %193 = vmatprep.subr.bf16.mxu0 0
    %194 = vmatpush1.bf16.msra.mxu0 0
    %195 = vmatprep.subr.bf16.mxu0 0
    %196 = vmatpush1.bf16.msra.mxu0 0
    %197 = vmatprep.subr.bf16.mxu0 0
    %198 = vmatpush1.bf16.msra.mxu0 0
    %199 = vmatprep.mubr.bf16.mxu0 0
    %200 = vmatmul.mubr.bf16.gmra.mrb[0].mxu0 %v165
    %v201 = vpop.f32.mrb[0].mxu0
    %v202 = vadd.f32 %v137, %v201
    %v203 = vpop.f32.mrb[0].mxu0
    %v204 = vpop.f32.mrb[0].mxu0
    %v205 = vpop.f32.mrb[0].mxu0
    %206 = vdwg.mxu0
    %v207 = vmin.f32 %v202, 20.0
    %v208 = vmul.f32 %v207, 1.442695
    %v209 = vpow.pop %v208
    %v210 = vadd.f32 %v209, 2.0
    %v211 = vmul.f32 %v209, %v210
    %v212 = vadd.f32 %v209, 1.0
    %v213 = vmul.f32 %v212, %v212
    %v214 = vadd.f32 %v213, 1.0
    %v215 = vmul.f32 %v202, %v211
    %v216 = vrcp.pop %v214
    %v217 = vmul.f32 %v215, %v216
    %vm218 = vcmp.gt.f32.partialorder %v202, 20.0
    %v219 = vsel %vm218, %v202, %v217
    %v220 = vpack.c.bf16 %v219, %v219
    %v221 = vld [vmem:[%s3] sm:$0xf]
    %v222 = vld [vmem:[%s3 + $0x4] sm:$0xf]
    %v223 = vld [vmem:[%s3 + $0x8] sm:$0xf]
    %v224 = vld [vmem:[%s3 + $0xc] sm:$0xf]
    %v225 = vld [vmem:[%s3 + $0x10] sm:$0xf]
    %v226 = vld [vmem:[%s3 + $0x14] sm:$0xf]
    %v227 = vld [vmem:[%s3 + $0x18] sm:$0xf]
    %v228 = vld [vmem:[%s3 + $0x1c] sm:$0xf]
    %v229 = vld [vmem:[%s3 + $0x20] sm:$0xf]
    %v230 = vld [vmem:[%s3 + $0x24] sm:$0xf]
    %v231 = vld [vmem:[%s3 + $0x28] sm:$0xf]
    %v232 = vld [vmem:[%s3 + $0x2c] sm:$0xf]
    %v233 = vld [vmem:[%s3 + $0x30] sm:$0xf]
    %v234 = vld [vmem:[%s3 + $0x34] sm:$0xf]
    %v235 = vld [vmem:[%s3 + $0x38] sm:$0xf]
    %v236 = vld [vmem:[%s3 + $0x3c] sm:$0xf]
    %v237 = vld [vmem:[%s4] sm:$0x1]
    %v239 = vlaneseq
    %v240 = vshrl.u32 %v239, 7
    %v241 = vsub.s32 0, %v240
    %v242 = vrot.slane %v237, %v241
    %v260 = vunpack.c.l.b16 %v221
    %v261 = vunpack.c.l.b16 %v222
    %v262 = vunpack.c.l.b16 %v223
    %v263 = vunpack.c.l.b16 %v224
    %v264 = vunpack.c.l.b16 %v225
    %v265 = vunpack.c.l.b16 %v226
    %v266 = vunpack.c.l.b16 %v227
    %v267 = vunpack.c.l.b16 %v228
    %v268 = vunpack.c.l.b16 %v229
    %v269 = vunpack.c.l.b16 %v230
    %v270 = vunpack.c.l.b16 %v231
    %v271 = vunpack.c.l.b16 %v232
    %v272 = vunpack.c.l.b16 %v233
    %v273 = vunpack.c.l.b16 %v234
    %v274 = vunpack.c.l.b16 %v235
    %v275 = vunpack.c.l.b16 %v236
    %v276 = vpack.c.b16 %v261, %v260
    %v277 = vpack.c.b16 %v263, %v262
    %v278 = vpack.c.b16 %v265, %v264
    %v279 = vpack.c.b16 %v267, %v266
    %v280 = vpack.c.b16 %v269, %v268
    %v281 = vpack.c.b16 %v271, %v270
    %v282 = vpack.c.b16 %v273, %v272
    %v283 = vpack.c.b16 %v275, %v274
    %292 = vmatprep.subr.bf16.mxu0 0
    %293 = vmatpush1.bf16.msra.mxu0 %v276
    %294 = vmatprep.subr.bf16.mxu0 0
    %295 = vmatpush1.bf16.msra.mxu0 %v277
    %296 = vmatprep.subr.bf16.mxu0 0
    %297 = vmatpush1.bf16.msra.mxu0 %v278
    %298 = vmatprep.subr.bf16.mxu0 0
    %299 = vmatpush1.bf16.msra.mxu0 %v279
    %300 = vmatprep.subr.bf16.mxu0 0
    %301 = vmatpush1.bf16.msra.mxu0 %v280
    %302 = vmatprep.subr.bf16.mxu0 0
    %303 = vmatpush1.bf16.msra.mxu0 %v281
    %304 = vmatprep.subr.bf16.mxu0 0
    %305 = vmatpush1.bf16.msra.mxu0 %v282
    %306 = vmatprep.subr.bf16.mxu0 0
    %307 = vmatpush1.bf16.msra.mxu0 %v283
    %308 = vmatprep.subr.bf16.mxu0 0
    %309 = vmatpush1.bf16.msra.mxu0 0
    %310 = vmatprep.subr.bf16.mxu0 0
    %311 = vmatpush1.bf16.msra.mxu0 0
    %312 = vmatprep.subr.bf16.mxu0 0
    %313 = vmatpush1.bf16.msra.mxu0 0
    %314 = vmatprep.subr.bf16.mxu0 0
    %315 = vmatpush1.bf16.msra.mxu0 0
    %316 = vmatprep.subr.bf16.mxu0 0
    %317 = vmatpush1.bf16.msra.mxu0 0
    %318 = vmatprep.subr.bf16.mxu0 0
    %319 = vmatpush1.bf16.msra.mxu0 0
    %320 = vmatprep.subr.bf16.mxu0 0
    %321 = vmatpush1.bf16.msra.mxu0 0
    %322 = vmatprep.subr.bf16.mxu0 0
    %323 = vmatpush1.bf16.msra.mxu0 0
    %324 = vmatprep.mubr.bf16.mxu0 0
    %325 = vmatmul.mubr.bf16.gmra.mrb[0].mxu0 %v220
    %v326 = vpop.f32.mrb[0].mxu0
    %v327 = vadd.f32 %v242, %v326
    %v328 = vpop.f32.mrb[0].mxu0
    %v329 = vpop.f32.mrb[0].mxu0
    %v330 = vpop.f32.mrb[0].mxu0
    %331 = vdwg.mxu0
    %v332 = vmin.f32 %v327, 20.0
    %v333 = vmul.f32 %v332, 1.442695
    %v334 = vpow.pop %v333
    %v335 = vadd.f32 %v334, 2.0
    %v336 = vmul.f32 %v334, %v335
    %v337 = vadd.f32 %v334, 1.0
    %v338 = vmul.f32 %v337, %v337
    %v339 = vadd.f32 %v338, 1.0
    %v340 = vmul.f32 %v327, %v336
    %v341 = vrcp.pop %v339
    %v342 = vmul.f32 %v340, %v341
    %vm343 = vcmp.gt.f32.partialorder %v327, 20.0
    %v344 = vsel %vm343, %v327, %v342
    %v345 = vpack.c.bf16 %v344, %v344
    %v346 = vld [vmem:[#allocation7] sm:$0xf]
    %v347 = vld [vmem:[#allocation7 + $0x4] sm:$0xf]
    %v348 = vld [vmem:[#allocation7 + $0x8] sm:$0xf]
    %v349 = vld [vmem:[#allocation7 + $0xc] sm:$0xf]
    %v350 = vld [vmem:[#allocation7 + $0x10] sm:$0xf]
    %v351 = vld [vmem:[#allocation7 + $0x14] sm:$0xf]
    %v352 = vld [vmem:[#allocation7 + $0x18] sm:$0xf]
    %v353 = vld [vmem:[#allocation7 + $0x1c] sm:$0xf]
    %v354 = vld [vmem:[#allocation7 + $0x20] sm:$0xf]
    %v355 = vld [vmem:[#allocation7 + $0x24] sm:$0xf]
    %v356 = vld [vmem:[#allocation7 + $0x28] sm:$0xf]
    %v357 = vld [vmem:[#allocation7 + $0x2c] sm:$0xf]
    %v358 = vld [vmem:[#allocation7 + $0x30] sm:$0xf]
    %v359 = vld [vmem:[#allocation7 + $0x34] sm:$0xf]
    %v360 = vld [vmem:[#allocation7 + $0x38] sm:$0xf]
    %v361 = vld [vmem:[#allocation7 + $0x3c] sm:$0xf]
    %v362 = vld [vmem:[#allocation8] sm:$0x1]
    %v364 = vlaneseq
    %v365 = vshrl.u32 %v364, 7
    %v366 = vsub.s32 0, %v365
    %v367 = vrot.slane %v362, %v366
    %v385 = vunpack.c.l.b16 %v346
    %v386 = vunpack.c.l.b16 %v347
    %v387 = vunpack.c.l.b16 %v348
    %v388 = vunpack.c.l.b16 %v349
    %v389 = vunpack.c.l.b16 %v350
    %v390 = vunpack.c.l.b16 %v351
    %v391 = vunpack.c.l.b16 %v352
    %v392 = vunpack.c.l.b16 %v353
    %v393 = vunpack.c.l.b16 %v354
    %v394 = vunpack.c.l.b16 %v355
    %v395 = vunpack.c.l.b16 %v356
    %v396 = vunpack.c.l.b16 %v357
    %v397 = vunpack.c.l.b16 %v358
    %v398 = vunpack.c.l.b16 %v359
    %v399 = vunpack.c.l.b16 %v360
    %v400 = vunpack.c.l.b16 %v361
    %v401 = vpack.c.b16 %v386, %v385
    %v402 = vpack.c.b16 %v388, %v387
    %v403 = vpack.c.b16 %v390, %v389
    %v404 = vpack.c.b16 %v392, %v391
    %v405 = vpack.c.b16 %v394, %v393
    %v406 = vpack.c.b16 %v396, %v395
    %v407 = vpack.c.b16 %v398, %v397
    %v408 = vpack.c.b16 %v400, %v399
    %417 = vmatprep.subr.bf16.mxu0 0
    %418 = vmatpush1.bf16.msra.mxu0 %v401
    %419 = vmatprep.subr.bf16.mxu0 0
    %420 = vmatpush1.bf16.msra.mxu0 %v402
    %421 = vmatprep.subr.bf16.mxu0 0
    %422 = vmatpush1.bf16.msra.mxu0 %v403
    %423 = vmatprep.subr.bf16.mxu0 0
    %424 = vmatpush1.bf16.msra.mxu0 %v404
    %425 = vmatprep.subr.bf16.mxu0 0
    %426 = vmatpush1.bf16.msra.mxu0 %v405
    %427 = vmatprep.subr.bf16.mxu0 0
    %428 = vmatpush1.bf16.msra.mxu0 %v406
    %429 = vmatprep.subr.bf16.mxu0 0
    %430 = vmatpush1.bf16.msra.mxu0 %v407
    %431 = vmatprep.subr.bf16.mxu0 0
    %432 = vmatpush1.bf16.msra.mxu0 %v408
    %433 = vmatprep.subr.bf16.mxu0 0
    %434 = vmatpush1.bf16.msra.mxu0 0
    %435 = vmatprep.subr.bf16.mxu0 0
    %436 = vmatpush1.bf16.msra.mxu0 0
    %437 = vmatprep.subr.bf16.mxu0 0
    %438 = vmatpush1.bf16.msra.mxu0 0
    %439 = vmatprep.subr.bf16.mxu0 0
    %440 = vmatpush1.bf16.msra.mxu0 0
    %441 = vmatprep.subr.bf16.mxu0 0
    %442 = vmatpush1.bf16.msra.mxu0 0
    %443 = vmatprep.subr.bf16.mxu0 0
    %444 = vmatpush1.bf16.msra.mxu0 0
    %445 = vmatprep.subr.bf16.mxu0 0
    %446 = vmatpush1.bf16.msra.mxu0 0
    %447 = vmatprep.subr.bf16.mxu0 0
    %448 = vmatpush1.bf16.msra.mxu0 0
    %449 = vmatprep.mubr.bf16.mxu0 0
    %450 = vmatmul.mubr.bf16.gmra.mrb[0].mxu0 %v345
    %v451 = vpop.f32.mrb[0].mxu0
    %v452 = vadd.f32 %v367, %v451
    %v453 = vpop.f32.mrb[0].mxu0
    %v454 = vpop.f32.mrb[0].mxu0
    %v455 = vpop.f32.mrb[0].mxu0
    %456 = vdwg.mxu0
    %v457 = vmin.f32 %v452, 20.0
    %v458 = vmul.f32 %v457, 1.442695
    %v459 = vpow.pop %v458
    %v460 = vadd.f32 %v459, 2.0
    %v461 = vmul.f32 %v459, %v460
    %v462 = vadd.f32 %v459, 1.0
    %v463 = vmul.f32 %v462, %v462
    %v464 = vadd.f32 %v463, 1.0
    %v465 = vmul.f32 %v452, %v461
    %v466 = vrcp.pop %v464
    %v467 = vmul.f32 %v465, %v466
    %vm468 = vcmp.gt.f32.partialorder %v452, 20.0
    %v469 = vsel %vm468, %v452, %v467
    %v470 = vpack.c.bf16 %v469, %v469
    %v471 = vld [vmem:[#allocation10] sm:$0xf]
    %v472 = vld [vmem:[#allocation10 + $0x4] sm:$0xf]
    %v473 = vld [vmem:[#allocation10 + $0x8] sm:$0xf]
    %v474 = vld [vmem:[#allocation10 + $0xc] sm:$0xf]
    %v475 = vld [vmem:[#allocation10 + $0x10] sm:$0xf]
    %v476 = vld [vmem:[#allocation10 + $0x14] sm:$0xf]
    %v477 = vld [vmem:[#allocation10 + $0x18] sm:$0xf]
    %v478 = vld [vmem:[#allocation10 + $0x1c] sm:$0xf]
    %v479 = vld [vmem:[#allocation10 + $0x20] sm:$0xf]
    %v480 = vld [vmem:[#allocation10 + $0x24] sm:$0xf]
    %v481 = vld [vmem:[#allocation10 + $0x28] sm:$0xf]
    %v482 = vld [vmem:[#allocation10 + $0x2c] sm:$0xf]
    %v483 = vld [vmem:[#allocation10 + $0x30] sm:$0xf]
    %v484 = vld [vmem:[#allocation10 + $0x34] sm:$0xf]
    %v485 = vld [vmem:[#allocation10 + $0x38] sm:$0xf]
    %v486 = vld [vmem:[#allocation10 + $0x3c] sm:$0xf]
    %v487 = vld [vmem:[#allocation11] sm:$0x1]
    %v489 = vlaneseq
    %v490 = vshrl.u32 %v489, 7
    %v491 = vsub.s32 0, %v490
    %v492 = vrot.slane %v487, %v491
    %v510 = vunpack.c.l.b16 %v471
    %v511 = vunpack.c.l.b16 %v472
    %v512 = vunpack.c.l.b16 %v473
    %v513 = vunpack.c.l.b16 %v474
    %v514 = vunpack.c.l.b16 %v475
    %v515 = vunpack.c.l.b16 %v476
    %v516 = vunpack.c.l.b16 %v477
    %v517 = vunpack.c.l.b16 %v478
    %v518 = vunpack.c.l.b16 %v479
    %v519 = vunpack.c.l.b16 %v480
    %v520 = vunpack.c.l.b16 %v481
    %v521 = vunpack.c.l.b16 %v482
    %v522 = vunpack.c.l.b16 %v483
    %v523 = vunpack.c.l.b16 %v484
    %v524 = vunpack.c.l.b16 %v485
    %v525 = vunpack.c.l.b16 %v486
    %v526 = vpack.c.b16 %v511, %v510
    %v527 = vpack.c.b16 %v513, %v512
    %v528 = vpack.c.b16 %v515, %v514
    %v529 = vpack.c.b16 %v517, %v516
    %v530 = vpack.c.b16 %v519, %v518
    %v531 = vpack.c.b16 %v521, %v520
    %v532 = vpack.c.b16 %v523, %v522
    %v533 = vpack.c.b16 %v525, %v524
    %542 = vmatprep.subr.bf16.mxu0 0
    %543 = vmatpush1.bf16.msra.mxu0 %v526
    %544 = vmatprep.subr.bf16.mxu0 0
    %545 = vmatpush1.bf16.msra.mxu0 %v527
    %546 = vmatprep.subr.bf16.mxu0 0
    %547 = vmatpush1.bf16.msra.mxu0 %v528
    %548 = vmatprep.subr.bf16.mxu0 0
    %549 = vmatpush1.bf16.msra.mxu0 %v529
    %550 = vmatprep.subr.bf16.mxu0 0
    %551 = vmatpush1.bf16.msra.mxu0 %v530
    %552 = vmatprep.subr.bf16.mxu0 0
    %553 = vmatpush1.bf16.msra.mxu0 %v531
    %554 = vmatprep.subr.bf16.mxu0 0
    %555 = vmatpush1.bf16.msra.mxu0 %v532
    %556 = vmatprep.subr.bf16.mxu0 0
    %557 = vmatpush1.bf16.msra.mxu0 %v533
    %558 = vmatprep.subr.bf16.mxu0 0
    %559 = vmatpush1.bf16.msra.mxu0 0
    %560 = vmatprep.subr.bf16.mxu0 0
    %561 = vmatpush1.bf16.msra.mxu0 0
    %562 = vmatprep.subr.bf16.mxu0 0
    %563 = vmatpush1.bf16.msra.mxu0 0
    %564 = vmatprep.subr.bf16.mxu0 0
    %565 = vmatpush1.bf16.msra.mxu0 0
    %566 = vmatprep.subr.bf16.mxu0 0
    %567 = vmatpush1.bf16.msra.mxu0 0
    %568 = vmatprep.subr.bf16.mxu0 0
    %569 = vmatpush1.bf16.msra.mxu0 0
    %570 = vmatprep.subr.bf16.mxu0 0
    %571 = vmatpush1.bf16.msra.mxu0 0
    %572 = vmatprep.subr.bf16.mxu0 0
    %573 = vmatpush1.bf16.msra.mxu0 0
    %574 = vmatprep.mubr.bf16.mxu0 0
    %575 = vmatmul.mubr.bf16.gmra.mrb[0].mxu0 %v470
    %v576 = vpop.f32.mrb[0].mxu0
    %v577 = vadd.f32 %v492, %v576
    %v578 = vpop.f32.mrb[0].mxu0
    %v579 = vpop.f32.mrb[0].mxu0
    %v580 = vpop.f32.mrb[0].mxu0
    %581 = vdwg.mxu0
    %v582 = vmin.f32 %v577, 20.0
    %v583 = vmul.f32 %v582, 1.442695
    %v584 = vpow.pop %v583
    %v585 = vadd.f32 %v584, 2.0
    %v586 = vmul.f32 %v584, %v585
    %v587 = vadd.f32 %v584, 1.0
    %v588 = vmul.f32 %v587, %v587
    %v589 = vadd.f32 %v588, 1.0
    %v590 = vmul.f32 %v577, %v586
    %v591 = vrcp.pop %v589
    %v592 = vmul.f32 %v590, %v591
    %vm593 = vcmp.gt.f32.partialorder %v577, 20.0
    %v594 = vsel %vm593, %v577, %v592
    %v595 = vpack.c.bf16 %v594, %v594
    %v596 = vld [vmem:[%s9] sm:$0xf]
    %v597 = vld [vmem:[%s9 + $0x4] sm:$0xf]
    %v598 = vld [vmem:[%s9 + $0x8] sm:$0xf]
    %v599 = vld [vmem:[%s9 + $0xc] sm:$0xf]
    %v600 = vld [vmem:[%s9 + $0x10] sm:$0xf]
    %v601 = vld [vmem:[%s9 + $0x14] sm:$0xf]
    %v602 = vld [vmem:[%s9 + $0x18] sm:$0xf]
    %v603 = vld [vmem:[%s9 + $0x1c] sm:$0xf]
    %v604 = vld [vmem:[%s9 + $0x20] sm:$0xf]
    %v605 = vld [vmem:[%s9 + $0x24] sm:$0xf]
    %v606 = vld [vmem:[%s9 + $0x28] sm:$0xf]
    %v607 = vld [vmem:[%s9 + $0x2c] sm:$0xf]
    %v608 = vld [vmem:[%s9 + $0x30] sm:$0xf]
    %v609 = vld [vmem:[%s9 + $0x34] sm:$0xf]
    %v610 = vld [vmem:[%s9 + $0x38] sm:$0xf]
    %v611 = vld [vmem:[%s9 + $0x3c] sm:$0xf]
    %v612 = vld [vmem:[%s10] sm:$0x1]
    %v614 = vlaneseq
    %v615 = vshrl.u32 %v614, 7
    %v616 = vsub.s32 0, %v615
    %v617 = vrot.slane %v612, %v616
    %v635 = vunpack.c.l.b16 %v596
    %v636 = vunpack.c.l.b16 %v597
    %v637 = vunpack.c.l.b16 %v598
    %v638 = vunpack.c.l.b16 %v599
    %v639 = vunpack.c.l.b16 %v600
    %v640 = vunpack.c.l.b16 %v601
    %v641 = vunpack.c.l.b16 %v602
    %v642 = vunpack.c.l.b16 %v603
    %v643 = vunpack.c.l.b16 %v604
    %v644 = vunpack.c.l.b16 %v605
    %v645 = vunpack.c.l.b16 %v606
    %v646 = vunpack.c.l.b16 %v607
    %v647 = vunpack.c.l.b16 %v608
    %v648 = vunpack.c.l.b16 %v609
    %v649 = vunpack.c.l.b16 %v610
    %v650 = vunpack.c.l.b16 %v611
    %v651 = vpack.c.b16 %v636, %v635
    %v652 = vpack.c.b16 %v638, %v637
    %v653 = vpack.c.b16 %v640, %v639
    %v654 = vpack.c.b16 %v642, %v641
    %v655 = vpack.c.b16 %v644, %v643
    %v656 = vpack.c.b16 %v646, %v645
    %v657 = vpack.c.b16 %v648, %v647
    %v658 = vpack.c.b16 %v650, %v649
    %667 = vmatprep.subr.bf16.mxu0 0
    %668 = vmatpush1.bf16.msra.mxu0 %v651
    %669 = vmatprep.subr.bf16.mxu0 0
    %670 = vmatpush1.bf16.msra.mxu0 %v652
    %671 = vmatprep.subr.bf16.mxu0 0
    %672 = vmatpush1.bf16.msra.mxu0 %v653
    %673 = vmatprep.subr.bf16.mxu0 0
    %674 = vmatpush1.bf16.msra.mxu0 %v654
    %675 = vmatprep.subr.bf16.mxu0 0
    %676 = vmatpush1.bf16.msra.mxu0 %v655
    %677 = vmatprep.subr.bf16.mxu0 0
    %678 = vmatpush1.bf16.msra.mxu0 %v656
    %679 = vmatprep.subr.bf16.mxu0 0
    %680 = vmatpush1.bf16.msra.mxu0 %v657
    %681 = vmatprep.subr.bf16.mxu0 0
    %682 = vmatpush1.bf16.msra.mxu0 %v658
    %683 = vmatprep.subr.bf16.mxu0 0
    %684 = vmatpush1.bf16.msra.mxu0 0
    %685 = vmatprep.subr.bf16.mxu0 0
    %686 = vmatpush1.bf16.msra.mxu0 0
    %687 = vmatprep.subr.bf16.mxu0 0
    %688 = vmatpush1.bf16.msra.mxu0 0
    %689 = vmatprep.subr.bf16.mxu0 0
    %690 = vmatpush1.bf16.msra.mxu0 0
    %691 = vmatprep.subr.bf16.mxu0 0
    %692 = vmatpush1.bf16.msra.mxu0 0
    %693 = vmatprep.subr.bf16.mxu0 0
    %694 = vmatpush1.bf16.msra.mxu0 0
    %695 = vmatprep.subr.bf16.mxu0 0
    %696 = vmatpush1.bf16.msra.mxu0 0
    %697 = vmatprep.subr.bf16.mxu0 0
    %698 = vmatpush1.bf16.msra.mxu0 0
    %699 = vmatprep.mubr.bf16.mxu0 0
    %700 = vmatmul.mubr.bf16.gmra.mrb[0].mxu0 %v595
    %v701 = vpop.f32.mrb[0].mxu0
    %v702 = vadd.f32 %v617, %v701
    %v703 = vpop.f32.mrb[0].mxu0
    %v704 = vpop.f32.mrb[0].mxu0
    %v705 = vpop.f32.mrb[0].mxu0
    %706 = vdwg.mxu0
    %v707 = vmin.f32 %v702, 20.0
    %v708 = vmul.f32 %v707, 1.442695
    %v709 = vpow.pop %v708
    %v710 = vadd.f32 %v709, 2.0
    %v711 = vmul.f32 %v709, %v710
    %v712 = vadd.f32 %v709, 1.0
    %v713 = vmul.f32 %v712, %v712
    %v714 = vadd.f32 %v713, 1.0
    %v715 = vmul.f32 %v702, %v711
    %v716 = vrcp.pop %v714
    %v717 = vmul.f32 %v715, %v716
    %vm718 = vcmp.gt.f32.partialorder %v702, 20.0
    %v719 = vsel %vm718, %v702, %v717
    %v720 = vpack.c.bf16 %v719, %v719
    %v721 = vld [vmem:[%s11] sm:$0xf]
    %v722 = vld [vmem:[%s11 + $0x4] sm:$0xf]
    %v723 = vld [vmem:[%s11 + $0x8] sm:$0xf]
    %v724 = vld [vmem:[%s11 + $0xc] sm:$0xf]
    %v725 = vld [vmem:[%s11 + $0x10] sm:$0xf]
    %v726 = vld [vmem:[%s11 + $0x14] sm:$0xf]
    %v727 = vld [vmem:[%s11 + $0x18] sm:$0xf]
    %v728 = vld [vmem:[%s11 + $0x1c] sm:$0xf]
    %v729 = vld [vmem:[%s11 + $0x20] sm:$0xf]
    %v730 = vld [vmem:[%s11 + $0x24] sm:$0xf]
    %v731 = vld [vmem:[%s11 + $0x28] sm:$0xf]
    %v732 = vld [vmem:[%s11 + $0x2c] sm:$0xf]
    %v733 = vld [vmem:[%s11 + $0x30] sm:$0xf]
    %v734 = vld [vmem:[%s11 + $0x34] sm:$0xf]
    %v735 = vld [vmem:[%s11 + $0x38] sm:$0xf]
    %v736 = vld [vmem:[%s11 + $0x3c] sm:$0xf]
    %v737 = vld [vmem:[%s12] sm:$0x1]
    %v739 = vlaneseq
    %v740 = vshrl.u32 %v739, 7
    %v741 = vsub.s32 0, %v740
    %v742 = vrot.slane %v737, %v741
    %v760 = vunpack.c.l.b16 %v721
    %v761 = vunpack.c.l.b16 %v722
    %v762 = vunpack.c.l.b16 %v723
    %v763 = vunpack.c.l.b16 %v724
    %v764 = vunpack.c.l.b16 %v725
    %v765 = vunpack.c.l.b16 %v726
    %v766 = vunpack.c.l.b16 %v727
    %v767 = vunpack.c.l.b16 %v728
    %v768 = vunpack.c.l.b16 %v729
    %v769 = vunpack.c.l.b16 %v730
    %v770 = vunpack.c.l.b16 %v731
    %v771 = vunpack.c.l.b16 %v732
    %v772 = vunpack.c.l.b16 %v733
    %v773 = vunpack.c.l.b16 %v734
    %v774 = vunpack.c.l.b16 %v735
    %v775 = vunpack.c.l.b16 %v736
    %v776 = vpack.c.b16 %v761, %v760
    %v777 = vpack.c.b16 %v763, %v762
    %v778 = vpack.c.b16 %v765, %v764
    %v779 = vpack.c.b16 %v767, %v766
    %v780 = vpack.c.b16 %v769, %v768
    %v781 = vpack.c.b16 %v771, %v770
    %v782 = vpack.c.b16 %v773, %v772
    %v783 = vpack.c.b16 %v775, %v774
    %792 = vmatprep.subr.bf16.mxu0 0
    %793 = vmatpush1.bf16.msra.mxu0 %v776
    %794 = vmatprep.subr.bf16.mxu0 0
    %795 = vmatpush1.bf16.msra.mxu0 %v777
    %796 = vmatprep.subr.bf16.mxu0 0
    %797 = vmatpush1.bf16.msra.mxu0 %v778
    %798 = vmatprep.subr.bf16.mxu0 0
    %799 = vmatpush1.bf16.msra.mxu0 %v779
    %800 = vmatprep.subr.bf16.mxu0 0
    %801 = vmatpush1.bf16.msra.mxu0 %v780
    %802 = vmatprep.subr.bf16.mxu0 0
    %803 = vmatpush1.bf16.msra.mxu0 %v781
    %804 = vmatprep.subr.bf16.mxu0 0
    %805 = vmatpush1.bf16.msra.mxu0 %v782
    %806 = vmatprep.subr.bf16.mxu0 0
    %807 = vmatpush1.bf16.msra.mxu0 %v783
    %808 = vmatprep.subr.bf16.mxu0 0
    %809 = vmatpush1.bf16.msra.mxu0 0
    %810 = vmatprep.subr.bf16.mxu0 0
    %811 = vmatpush1.bf16.msra.mxu0 0
    %812 = vmatprep.subr.bf16.mxu0 0
    %813 = vmatpush1.bf16.msra.mxu0 0
    %814 = vmatprep.subr.bf16.mxu0 0
    %815 = vmatpush1.bf16.msra.mxu0 0
    %816 = vmatprep.subr.bf16.mxu0 0
    %817 = vmatpush1.bf16.msra.mxu0 0
    %818 = vmatprep.subr.bf16.mxu0 0
    %819 = vmatpush1.bf16.msra.mxu0 0
    %820 = vmatprep.subr.bf16.mxu0 0
    %821 = vmatpush1.bf16.msra.mxu0 0
    %822 = vmatprep.subr.bf16.mxu0 0
    %823 = vmatpush1.bf16.msra.mxu0 0
    %824 = vmatprep.mubr.bf16.mxu0 0
    %825 = vmatmul.mubr.bf16.gmra.mrb[0].mxu0 %v720
    %v826 = vpop.f32.mrb[0].mxu0
    %v827 = vadd.f32 %v742, %v826
    %v828 = vpop.f32.mrb[0].mxu0
    %v829 = vpop.f32.mrb[0].mxu0
    %v830 = vpop.f32.mrb[0].mxu0
    %831 = vdwg.mxu0
    %v832 = vmin.f32 %v827, 20.0
    %v833 = vmul.f32 %v832, 1.442695
    %v834 = vpow.pop %v833
    %v835 = vadd.f32 %v834, 2.0
    %v836 = vmul.f32 %v834, %v835
    %v837 = vadd.f32 %v834, 1.0
    %v838 = vmul.f32 %v837, %v837
    %v839 = vadd.f32 %v838, 1.0
    %v840 = vmul.f32 %v827, %v836
    %v841 = vrcp.pop %v839
    %v842 = vmul.f32 %v840, %v841
    %vm843 = vcmp.gt.f32.partialorder %v827, 20.0
    %v844 = vsel %vm843, %v827, %v842
    %845 = vst.msk [vmem:[#allocation13] sm:$0xff] %vm163, %v844
    // Predicated region
    $region78: #{autoencoder_forward.1} parent=1 // pred_check
      _
    $region79: #{autoencoder_forward.1} parent=1 // pred_check_branch
      %847 = sbr.rel (0) target = $region81
    $region80: #{autoencoder_forward.1} parent=1 // pred_region
      %s849 = ssub.s32 128, 128
      %850 = vsyncadd [#allocation4], %s849
      %s852 = sshll.u32 [#allocation13], 4
      %s853 = int_to_ptr.vmem [resolvable:$true] %s852
      %855 = dma.vmem_to_hbm [thread:$0]  %s853, 128, %s13, [#allocation4]
    $region81: #{autoencoder_forward.1} parent=1 // pred_fallthru
      _
    // Predicated region
    $region82: #{autoencoder_forward.1} parent=1 // pred_check
      _
    $region83: #{autoencoder_forward.1} parent=1 // pred_check_branch
      %857 = sbr.rel (0) target = $region85
    $region84: #{autoencoder_forward.1} parent=1 // pred_region
      %858 = dma.done [#allocation4], 128
    $region85: #{autoencoder_forward.1} parent=1 // pred_fallthru
      _
    %859 = vsyncpa [#allocation3], 1
    %860 = vsyncpa [#allocation6], 1
    %861 = vsyncpa [#allocation9], 1
    %862 = vsyncpa [#allocation12], 1
    %863 = vsyncpa [#allocation4], 1

</llo_original>
